<compile_context>
chip_gen: v6e
topology: v6e:2x2x1
jax: 0.10.0
libtpu: 0.0.40
codegen_flags: <defaults>
</compile_context>

<pallas_src>
import jax
import jax.numpy as jnp
from jax.experimental import pallas as pl
from jax.experimental.pallas import tpu as pltpu

_LANE = 128
_SUBLANE = 8
_HIDDEN = 16
_X_TILE_BYTES_BUDGET = 2 << 20   # ~2 MiB per x tile (x2 double-buffered -> ~4 MiB)


def _round_up(n, m):
    return (n + m - 1) // m * m


def _mlp_softmax_kernel(x_ref, w1_ref, b1_ref, w2_ref, b2_ref, out_ref):
    # x_ref: (TB, D)    w1_ref: (D, 16)    b1_ref: (1, 16)
    # w2_ref: (16, NCP) b2_ref: (1, NCP)   out_ref: (TB, NCP)  (NCP = num_class -> 128)
    h = jnp.dot(x_ref[...], w1_ref[...], preferred_element_type=jnp.float32)
    h = jnp.maximum(h + b1_ref[...], 0.0)

    # Second linear layer onto a full 128-lane (padded-class) operand.
    logits = jnp.dot(h, w2_ref[...], preferred_element_type=jnp.float32) + b2_ref[...]

    # Numerically stable softmax over the class dim. Padded lanes hold a -1e30 bias,
    # so they never win the max and exp() underflows to 0 -> denominator is exact.
    m = jnp.max(logits, axis=-1, keepdims=True)
    e = jnp.exp(logits - m)
    denom = jnp.sum(e, axis=-1, keepdims=True)
    out_ref[...] = (e * pl.reciprocal(denom, approx=False)).astype(out_ref.dtype)


def multiclass_forward(x, w1, b1, w2, b2):
    """Forward pass of MulticlassNetwork.

    x : [B, input_size] (extra trailing dims are flattened)
    w1: [input_size, 16]      b1: [16]
    w2: [16, num_class]       b2: [num_class]
    Returns softmax probabilities, shape [B, num_class], float32.
    """
    B = x.shape[0]
    x2d = x.reshape(B, -1)
    if x2d.dtype != jnp.float32:
        x2d = x2d.astype(jnp.float32)
    D = x2d.shape[1]
    num_class = w2.shape[-1]

    # --- one-time parameter prep (tiny, plain JAX) -----------------------------------
    ncp = _round_up(max(num_class, 1), _LANE)          # lane-dense class dim
    w1p = w1.astype(jnp.float32)
    b1p = b1.reshape(1, _HIDDEN).astype(jnp.float32)
    w2p = jnp.zeros((_HIDDEN, ncp), jnp.float32).at[:, :num_class].set(
        w2.astype(jnp.float32))
    b2p = jnp.full((1, ncp), -1e30, jnp.float32).at[:, :num_class].set(
        b2.reshape(1, -1).astype(jnp.float32))

    # --- batch tiling -----------------------------------------------------------------
    # Cap the x tile at ~2 MiB (double-buffered -> ~4 MiB) so scoped VMEM is safe for
    # any input_size, while TB stays large enough to amortize per-grid-step overhead.
    tb_vmem = max(_SUBLANE, (_X_TILE_BYTES_BUDGET // (4 * D)) // _SUBLANE * _SUBLANE)
    tb = min(512, tb_vmem, _round_up(B, _SUBLANE))
    b_pad = _round_up(B, tb)
    if b_pad != B:
        x2d = jnp.pad(x2d, ((0, b_pad - B), (0, 0)))

    grid = (b_pad // tb,)
    cost = pl.CostEstimate(
        flops=2 * b_pad * D * _HIDDEN + 2 * b_pad * _HIDDEN * ncp,
        transcendentals=b_pad * ncp,
        bytes_accessed=4 * (b_pad * D + b_pad * ncp
                            + D * _HIDDEN + _HIDDEN + _HIDDEN * ncp + ncp),
    )

    out = pl.pallas_call(
        _mlp_softmax_kernel,
        out_shape=jax.ShapeDtypeStruct((b_pad, ncp), jnp.float32),
        grid_spec=pltpu.PrefetchScalarGridSpec(
            num_scalar_prefetch=0,
            grid=grid,
            in_specs=[
                pl.BlockSpec((tb, D), lambda i: (i, 0)),        # x: streamed, pipelined
                pl.BlockSpec((D, _HIDDEN), lambda i: (0, 0)),   # weights: VMEM-resident
                pl.BlockSpec((1, _HIDDEN), lambda i: (0, 0)),
                pl.BlockSpec((_HIDDEN, ncp), lambda i: (0, 0)),
                pl.BlockSpec((1, ncp), lambda i: (0, 0)),
            ],
            out_specs=pl.BlockSpec((tb, ncp), lambda i: (i, 0)),
        ),
        compiler_params=pltpu.CompilerParams(
            dimension_semantics=("parallel",),   # shard batch tiles across v7x's 2 TCs
        ),
        cost_estimate=cost,
    )(x2d, w1p, b1p, w2p, b2p)

    return out[:B, :num_class]


def init_params(key, input_size, num_class):
    """Deterministic init mimicking nn.Linear defaults (U(-1/sqrt(fan_in), 1/sqrt(fan_in)))."""
    k1, k2, k3, k4 = jax.random.split(key, 4)
    bound1 = 1.0 / jnp.sqrt(jnp.float32(input_size))
    bound2 = 1.0 / jnp.sqrt(jnp.float32(_HIDDEN))
    w1 = jax.random.uniform(k1, (input_size, _HIDDEN), jnp.float32, -bound1, bound1)
    b1 = jax.random.uniform(k2, (_HIDDEN,), jnp.float32, -bound1, bound1)
    w2 = jax.random.uniform(k3, (_HIDDEN, num_class), jnp.float32, -bound2, bound2)
    b2 = jax.random.uniform(k4, (num_class,), jnp.float32, -bound2, bound2)
    return w1, b1, w2, b2


if __name__ == "__main__":
    key = jax.random.PRNGKey(0)
    kx, kp = jax.random.split(key)

    # Small shapes consistent with the module: 2D input [batch, input_size], 3 classes.
    B, input_size, num_class = 2, 32, 3
    x = jax.random.normal(kx, (B, input_size), jnp.float32)
    w1, b1, w2, b2 = init_params(kp, input_size, num_class)

    out = multiclass_forward(x, w1, b1, w2, b2)
    out = jax.block_until_ready(out)

    # Reference in plain JAX (same math as the PyTorch module).
    h = jnp.maximum(x @ w1 + b1, 0.0)
    ref = jax.nn.softmax(h @ w2 + b2, axis=1)
    assert out.shape == (B, num_class), out.shape
    assert jnp.allclose(out, ref, atol=1e-5), (out, ref)
    assert jnp.allclose(jnp.sum(out, axis=1), 1.0, atol=1e-5)

    print("KERNEL_OK")
</pallas_src>

<mosaic_0001>
module attributes {stable_mosaic.version = 11 : i64} {
  func.func @_mlp_softmax_kernel(%arg0: i32, %arg1: memref<8x32xf32, #tpu.memory_space<vmem>>, %arg2: memref<32x16xf32, #tpu.memory_space<vmem>>, %arg3: memref<1x16xf32, #tpu.memory_space<vmem>>, %arg4: memref<16x128xf32, #tpu.memory_space<vmem>>, %arg5: memref<1x128xf32, #tpu.memory_space<vmem>>, %arg6: memref<8x128xf32, #tpu.memory_space<vmem>>) attributes {dimension_semantics = [#tpu.dimension_semantics<parallel>], iteration_bounds = array<i64: 1>, scalar_prefetch = 0 : i64, scratch_operands = 0 : i64, tpu.core_type = #tpu.core_type<tc>, window_params = [{transform_indices = @transform_0, window_bounds = array<i64: 8, 32>}, {pipeline_mode = #tpu.pipeline_mode<synchronous>, transform_indices = @transform_1, window_bounds = array<i64: 32, 16>}, {pipeline_mode = #tpu.pipeline_mode<synchronous>, transform_indices = @transform_2, window_bounds = array<i64: 1, 16>}, {pipeline_mode = #tpu.pipeline_mode<synchronous>, transform_indices = @transform_3, window_bounds = array<i64: 16, 128>}, {pipeline_mode = #tpu.pipeline_mode<synchronous>, transform_indices = @transform_4, window_bounds = array<i64: 1, 128>}, {transform_indices = @transform_5, window_bounds = array<i64: 8, 128>}]} {
    %c0 = arith.constant 0 : index
    %c0_0 = arith.constant 0 : index
    %0 = vector.load %arg1[%c0, %c0_0] : memref<8x32xf32, #tpu.memory_space<vmem>>, vector<8x32xf32>
    %c0_1 = arith.constant 0 : index
    %c0_2 = arith.constant 0 : index
    %1 = vector.load %arg2[%c0_1, %c0_2] : memref<32x16xf32, #tpu.memory_space<vmem>>, vector<32x16xf32>
    %cst = arith.constant dense<0.000000e+00> : vector<8x16xf32>
    %2 = tpu.matmul %0, %1, %cst {dimension_numbers = #tpu.dot_dimension_numbers<[1], [0], [0], [1], [0, 0, 1, 1], [], []>} : vector<8x32xf32>, vector<32x16xf32>, vector<8x16xf32> -> vector<8x16xf32>
    %c0_3 = arith.constant 0 : index
    %c0_4 = arith.constant 0 : index
    %3 = vector.load %arg3[%c0_3, %c0_4] : memref<1x16xf32, #tpu.memory_space<vmem>>, vector<1x16xf32>
    %4 = vector.broadcast %3 : vector<1x16xf32> to vector<8x16xf32>
    %5 = arith.addf %2, %4 : vector<8x16xf32>
    %cst_5 = arith.constant 0.000000e+00 : f32
    %6 = vector.broadcast %cst_5 : f32 to vector<8x16xf32>
    %7 = arith.maximumf %5, %6 : vector<8x16xf32>
    %c0_6 = arith.constant 0 : index
    %c0_7 = arith.constant 0 : index
    %8 = vector.load %arg4[%c0_6, %c0_7] : memref<16x128xf32, #tpu.memory_space<vmem>>, vector<16x128xf32>
    %cst_8 = arith.constant dense<0.000000e+00> : vector<8x128xf32>
    %9 = tpu.matmul %7, %8, %cst_8 {dimension_numbers = #tpu.dot_dimension_numbers<[1], [0], [0], [1], [0, 0, 1, 1], [], []>} : vector<8x16xf32>, vector<16x128xf32>, vector<8x128xf32> -> vector<8x128xf32>
    %c0_9 = arith.constant 0 : index
    %c0_10 = arith.constant 0 : index
    %10 = vector.load %arg5[%c0_9, %c0_10] : memref<1x128xf32, #tpu.memory_space<vmem>>, vector<1x128xf32>
    %11 = vector.broadcast %10 : vector<1x128xf32> to vector<8x128xf32>
    %12 = arith.addf %9, %11 : vector<8x128xf32>
    %cst_11 = arith.constant dense<0xFF800000> : vector<8xf32>
    %13 = vector.multi_reduction <maximumf>, %12, %cst_11 [1] : vector<8x128xf32> to vector<8xf32>
    %14 = vector.shape_cast %13 : vector<8xf32> to vector<8x1xf32>
    %15 = vector.broadcast %14 : vector<8x1xf32> to vector<8x128xf32>
    %16 = arith.subf %12, %15 : vector<8x128xf32>
    %17 = math.exp %16 : vector<8x128xf32>
    %cst_12 = arith.constant dense<0.000000e+00> : vector<8xf32>
    %18 = vector.multi_reduction <add>, %17, %cst_12 [1] : vector<8x128xf32> to vector<8xf32>
    %19 = vector.shape_cast %18 : vector<8xf32> to vector<8x1xf32>
    %20 = tpu.reciprocal %19 : vector<8x1xf32> -> vector<8x1xf32>
    %21 = vector.broadcast %20 : vector<8x1xf32> to vector<8x128xf32>
    %22 = arith.mulf %17, %21 : vector<8x128xf32>
    %c0_13 = arith.constant 0 : index
    %c0_14 = arith.constant 0 : index
    %23 = vector.load %arg6[%c0_13, %c0_14] : memref<8x128xf32, #tpu.memory_space<vmem>>, vector<8x128xf32>
    tpu.vector_store %arg6[%c0_13, %c0_14], %22 {strides = array<i32>} : memref<8x128xf32, #tpu.memory_space<vmem>>, vector<8x128xf32>,
    return
  }
  func.func @transform_0(%arg0: i32) -> (i32, i32) {
    %c0_i32 = arith.constant 0 : i32
    %c0_i32_0 = arith.constant 0 : i32
    return %arg0, %c0_i32 : i32, i32
  }
  func.func @transform_1(%arg0: i32) -> (i32, i32) {
    %c0_i32 = arith.constant 0 : i32
    %c0_i32_0 = arith.constant 0 : i32
    %c0_i32_1 = arith.constant 0 : i32
    return %c0_i32, %c0_i32_0 : i32, i32
  }
  func.func @transform_2(%arg0: i32) -> (i32, i32) {
    %c0_i32 = arith.constant 0 : i32
    %c0_i32_0 = arith.constant 0 : i32
    %c0_i32_1 = arith.constant 0 : i32
    return %c0_i32, %c0_i32_0 : i32, i32
  }
  func.func @transform_3(%arg0: i32) -> (i32, i32) {
    %c0_i32 = arith.constant 0 : i32
    %c0_i32_0 = arith.constant 0 : i32
    %c0_i32_1 = arith.constant 0 : i32
    return %c0_i32, %c0_i32_0 : i32, i32
  }
  func.func @transform_4(%arg0: i32) -> (i32, i32) {
    %c0_i32 = arith.constant 0 : i32
    %c0_i32_0 = arith.constant 0 : i32
    %c0_i32_1 = arith.constant 0 : i32
    return %c0_i32, %c0_i32_0 : i32, i32
  }
  func.func @transform_5(%arg0: i32) -> (i32, i32) {
    %c0_i32 = arith.constant 0 : i32
    %c0_i32_0 = arith.constant 0 : i32
    return %arg0, %c0_i32 : i32, i32
  }
}

</mosaic_0001>

<llo_original>
// kernel: tpu_custom_call.1
$region0: #{tpu_custom_call.1}
  #allocation0 [shape = 'u32[]', space=smem, size = 0x4, offset = 0x4, fixed_abs, tag = 'smem constant byte address 0x4 - core index']
  #allocation1 [shape = 'u32[144,128]{1,0:T(1,128)}', space=vmem, size = 0x12000, scoped, tag = 'internal scratch']
  %s0 = inlined_call_operand.vmem [shape: f32[8,32], index: 0, kind: input, shape index: {}]
  %s1 = inlined_call_operand.vmem [shape: f32[32,16], index: 1, kind: input, shape index: {}]
  %s2 = inlined_call_operand.vmem [shape: f32[1,16], index: 2, kind: input, shape index: {}]
  %s3 = inlined_call_operand.vmem [shape: f32[16,128], index: 3, kind: input, shape index: {}]
  %s4 = inlined_call_operand.vmem [shape: f32[1,128], index: 4, kind: input, shape index: {}]
  %s5 = inlined_call_operand.hbm [shape: f32[8,128], index: 5, kind: output, shape index: {}]
  %s6 = sld [smem:[#allocation0]]
  $region30: #{tpu_custom_call.1} parent=0
    _
  %s8 = ssub.s32 1, %s6
  %s9 = scalar_select 0, %s8, %s6
  $region1: #{tpu_custom_call.1} parent=0
    #allocation2 [shape = 'u8[4096]{0}', space=vmem, size = 0x1000, scoped, tag = 'output window, operand 0, single buffered']
    #allocation3 [shape = 's32[1]{0}', space=sflag, size = 0x4, scoped, tag = 'scoped memory for tpu_custom_call.1']
    %10 = vsyncpa [#allocation3], 0
    // Predicated region
    $region2: #{tpu_custom_call.1} parent=1 // pred_check
      _
    $region3: #{tpu_custom_call.1} parent=1 // pred_check_branch
      %12 = sbr.rel (0) target = $region5
    $region4: #{tpu_custom_call.1} parent=1 // pred_region
      _
    $region5: #{tpu_custom_call.1} parent=1 // pred_fallthru
      _
    // Predicated region
    $region6: #{tpu_custom_call.1} parent=1 // pred_check
      _
    $region7: #{tpu_custom_call.1} parent=1 // pred_check_branch
      %14 = sbr.rel (0) target = $region9
    $region8: #{tpu_custom_call.1} parent=1 // pred_region
      _
    $region9: #{tpu_custom_call.1} parent=1 // pred_fallthru
      _
    // Predicated region
    $region10: #{tpu_custom_call.1} parent=1 // pred_check
      _
    $region11: #{tpu_custom_call.1} parent=1 // pred_check_branch
      %16 = sbr.rel (0) target = $region13
    $region12: #{tpu_custom_call.1} parent=1 // pred_region
      _
    $region13: #{tpu_custom_call.1} parent=1 // pred_fallthru
      _
    // Predicated region
    $region14: #{tpu_custom_call.1} parent=1 // pred_check
      _
    $region15: #{tpu_custom_call.1} parent=1 // pred_check_branch
      %18 = sbr.rel (0) target = $region17
    $region16: #{tpu_custom_call.1} parent=1 // pred_region
      _
    $region17: #{tpu_custom_call.1} parent=1 // pred_fallthru
      _
    // Predicated region
    $region18: #{tpu_custom_call.1} parent=1 // pred_check
      _
    $region19: #{tpu_custom_call.1} parent=1 // pred_check_branch
      %20 = sbr.rel (0) target = $region21
    $region20: #{tpu_custom_call.1} parent=1 // pred_region
      _
    $region21: #{tpu_custom_call.1} parent=1 // pred_fallthru
      _
    %v21 = vld [vmem:[%s0] sm:$0xff]
    %v22 = vld [vmem:[%s1] sm:$0xff]
    %v23 = vld [vmem:[%s1 + $0x8] sm:$0xff]
    %v24 = vld [vmem:[%s1 + $0x10] sm:$0xff]
    %v25 = vld [vmem:[%s1 + $0x18] sm:$0xff]
    %v26 = vld [vmem:[%s2] sm:$0x1]
    %v28 = vlaneseq
    %v29 = vshrl.u32 %v28, 7
    %v30 = vsub.s32 0, %v29
    %v31 = vrot.slane %v26, %v30
    %vm33 = vcmask 261120
    %v35 = vsel %vm33, %v21, 0
    %37 = vmatprep.subr.mxu0 0.0
    %38 = vmatpush1.msra.mxu0 0.0
    %39 = vmatprep.subr.mxu0 0.0
    %40 = vmatpush1.msra.mxu0 0.0
    %41 = vmatprep.subr.mxu0 0.0
    %42 = vmatpush1.msra.mxu0 0.0
    %43 = vmatprep.subr.mxu0 0.0
    %44 = vmatpush1.msra.mxu0 0.0
    %45 = vmatprep.subr.mxu0 0.0
    %46 = vmatpush1.msra.mxu0 0.0
    %47 = vmatprep.subr.mxu0 0.0
    %48 = vmatpush1.msra.mxu0 0.0
    %49 = vmatprep.subr.mxu0 0.0
    %50 = vmatpush1.msra.mxu0 0.0
    %51 = vmatprep.subr.mxu0 0.0
    %52 = vmatpush1.msra.mxu0 0.0
    %53 = vmatprep.subr.mxu0 0.0
    %54 = vmatpush1.msra.mxu0 0.0
    %55 = vmatprep.subr.mxu0 0.0
    %56 = vmatpush1.msra.mxu0 0.0
    %57 = vmatprep.subr.mxu0 0.0
    %58 = vmatpush1.msra.mxu0 0.0
    %59 = vmatprep.subr.mxu0 0.0
    %60 = vmatpush1.msra.mxu0 0.0
    %61 = vmatprep.subr.mxu0 0.0
    %62 = vmatpush1.msra.mxu0 %v25
    %63 = vmatprep.subr.mxu0 0.0
    %64 = vmatpush1.msra.mxu0 %v24
    %65 = vmatprep.subr.mxu0 0.0
    %66 = vmatpush1.msra.mxu0 %v23
    %67 = vmatprep.subr.mxu0 0.0
    %68 = vmatpush1.msra.mxu0 %v22
    %69 = vmatprep.subr.mxu0 0.0
    %70 = vmatpush2.msra.mxu0 0.0
    %71 = vmatprep.subr.mxu0 0.0
    %72 = vmatpush2.msra.mxu0 0.0
    %73 = vmatprep.subr.mxu0 0.0
    %74 = vmatpush2.msra.mxu0 0.0
    %75 = vmatprep.subr.mxu0 0.0
    %76 = vmatpush2.msra.mxu0 0.0
    %77 = vmatprep.subr.mxu0 0.0
    %78 = vmatpush2.msra.mxu0 0.0
    %79 = vmatprep.subr.mxu0 0.0
    %80 = vmatpush2.msra.mxu0 0.0
    %81 = vmatprep.subr.mxu0 0.0
    %82 = vmatpush2.msra.mxu0 0.0
    %83 = vmatprep.subr.mxu0 0.0
    %84 = vmatpush2.msra.mxu0 0.0
    %85 = vmatprep.subr.mxu0 0.0
    %86 = vmatpush2.msra.mxu0 0.0
    %87 = vmatprep.subr.mxu0 0.0
    %88 = vmatpush2.msra.mxu0 0.0
    %89 = vmatprep.subr.mxu0 0.0
    %90 = vmatpush2.msra.mxu0 0.0
    %91 = vmatprep.subr.mxu0 0.0
    %92 = vmatpush2.msra.mxu0 0.0
    %93 = vmatprep.subr.mxu0 0.0
    %94 = vmatpush2.msra.mxu0 0.0
    %95 = vmatprep.subr.mxu0 0.0
    %96 = vmatpush2.msra.mxu0 0.0
    %97 = vmatprep.subr.mxu0 0.0
    %98 = vmatpush2.msra.mxu0 0.0
    %99 = vmatprep.subr.mxu0 0.0
    %100 = vmatpush2.msra.mxu0 0.0
    %101 = vmatprep.mubr.f32.mxu0 0.0
    %102 = vmatmul.mubr.f32.gmra.mxu0 %v35
    %v103 = vpop.f32.mrf.mxu0
    %v104 = vadd.f32 %v31, %v103
    %v105 = vpop.f32.mrf.mxu0
    %106 = vdwg.mxu0
    %v107 = vmax.f32 %v104, 0.0
    %v108 = vld [vmem:[%s3] sm:$0xff]
    %v109 = vld [vmem:[%s3 + $0x8] sm:$0xff]
    %v110 = vld [vmem:[%s4] sm:$0x1]
    %v112 = vlaneseq
    %v113 = vshrl.u32 %v112, 7
    %v114 = vsub.s32 0, %v113
    %v115 = vrot.slane %v110, %v114
    %vm117 = vcmask 130048
    %v119 = vsel %vm117, %v107, 0
    %121 = vmatprep.subr.mxu0 0.0
    %122 = vmatpush1.msra.mxu0 0.0
    %123 = vmatprep.subr.mxu0 0.0
    %124 = vmatpush1.msra.mxu0 0.0
    %125 = vmatprep.subr.mxu0 0.0
    %126 = vmatpush1.msra.mxu0 0.0
    %127 = vmatprep.subr.mxu0 0.0
    %128 = vmatpush1.msra.mxu0 0.0
    %129 = vmatprep.subr.mxu0 0.0
    %130 = vmatpush1.msra.mxu0 0.0
    %131 = vmatprep.subr.mxu0 0.0
    %132 = vmatpush1.msra.mxu0 0.0
    %133 = vmatprep.subr.mxu0 0.0
    %134 = vmatpush1.msra.mxu0 0.0
    %135 = vmatprep.subr.mxu0 0.0
    %136 = vmatpush1.msra.mxu0 0.0
    %137 = vmatprep.subr.mxu0 0.0
    %138 = vmatpush1.msra.mxu0 0.0
    %139 = vmatprep.subr.mxu0 0.0
    %140 = vmatpush1.msra.mxu0 0.0
    %141 = vmatprep.subr.mxu0 0.0
    %142 = vmatpush1.msra.mxu0 0.0
    %143 = vmatprep.subr.mxu0 0.0
    %144 = vmatpush1.msra.mxu0 0.0
    %145 = vmatprep.subr.mxu0 0.0
    %146 = vmatpush1.msra.mxu0 0.0
    %147 = vmatprep.subr.mxu0 0.0
    %148 = vmatpush1.msra.mxu0 0.0
    %149 = vmatprep.subr.mxu0 0.0
    %150 = vmatpush1.msra.mxu0 %v109
    %151 = vmatprep.subr.mxu0 0.0
    %152 = vmatpush1.msra.mxu0 %v108
    %153 = vmatprep.subr.mxu0 0.0
    %154 = vmatpush2.msra.mxu0 0.0
    %155 = vmatprep.subr.mxu0 0.0
    %156 = vmatpush2.msra.mxu0 0.0
    %157 = vmatprep.subr.mxu0 0.0
    %158 = vmatpush2.msra.mxu0 0.0
    %159 = vmatprep.subr.mxu0 0.0
    %160 = vmatpush2.msra.mxu0 0.0
    %161 = vmatprep.subr.mxu0 0.0
    %162 = vmatpush2.msra.mxu0 0.0
    %163 = vmatprep.subr.mxu0 0.0
    %164 = vmatpush2.msra.mxu0 0.0
    %165 = vmatprep.subr.mxu0 0.0
    %166 = vmatpush2.msra.mxu0 0.0
    %167 = vmatprep.subr.mxu0 0.0
    %168 = vmatpush2.msra.mxu0 0.0
    %169 = vmatprep.subr.mxu0 0.0
    %170 = vmatpush2.msra.mxu0 0.0
    %171 = vmatprep.subr.mxu0 0.0
    %172 = vmatpush2.msra.mxu0 0.0
    %173 = vmatprep.subr.mxu0 0.0
    %174 = vmatpush2.msra.mxu0 0.0
    %175 = vmatprep.subr.mxu0 0.0
    %176 = vmatpush2.msra.mxu0 0.0
    %177 = vmatprep.subr.mxu0 0.0
    %178 = vmatpush2.msra.mxu0 0.0
    %179 = vmatprep.subr.mxu0 0.0
    %180 = vmatpush2.msra.mxu0 0.0
    %181 = vmatprep.subr.mxu0 0.0
    %182 = vmatpush2.msra.mxu0 0.0
    %183 = vmatprep.subr.mxu0 0.0
    %184 = vmatpush2.msra.mxu0 0.0
    %185 = vmatprep.mubr.f32.mxu0 0.0
    %186 = vmatmul.mubr.f32.gmra.mxu0 %v119
    %v187 = vpop.f32.mrf.mxu0
    %v188 = vadd.f32 %v115, %v187
    %v189 = vpop.f32.mrf.mxu0
    %190 = vdwg.mxu0
    %191 = vmax.xlane.f32.xlu0 %v188
    %v192 = vpop.xlane.xlu0 %191
    %v193 = vsub.f32 %v188, %v192
    %v194 = vmul.f32 %v193, 1.442695
    %v195 = vpow.pop %v194
    %196 = vadd.xlane.f32.xlu0 %v195
    %v197 = vpop.xlane.xlu0 %196
    %v198 = vrcp.pop %v197
    %v199 = vmul.f32 %v195, %v198
    %200 = vst [vmem:[#allocation2] sm:$0xff] %v199
    // Predicated region
    $region22: #{tpu_custom_call.1} parent=1 // pred_check
      _
    $region23: #{tpu_custom_call.1} parent=1 // pred_check_branch
      %202 = sbr.rel (0) target = $region25
    $region24: #{tpu_custom_call.1} parent=1 // pred_region
      %s204 = ssub.s32 128, 128
      %205 = vsyncadd [#allocation3], %s204
      %s207 = sshll.u32 [#allocation2], 4
      %s208 = int_to_ptr.vmem [resolvable:$true] %s207
      %210 = dma.vmem_to_hbm [thread:$0]  %s208, 128, %s5, [#allocation3]
    $region25: #{tpu_custom_call.1} parent=1 // pred_fallthru
      _
    // Predicated region
    $region26: #{tpu_custom_call.1} parent=1 // pred_check
      _
    $region27: #{tpu_custom_call.1} parent=1 // pred_check_branch
      %212 = sbr.rel (0) target = $region29
    $region28: #{tpu_custom_call.1} parent=1 // pred_region
      %213 = dma.done [#allocation3], 128
    $region29: #{tpu_custom_call.1} parent=1 // pred_fallthru
      _
    %214 = vsyncpa [#allocation3], 1

</llo_original>
